<compile_context>
chip_gen: v7x
topology: tpu7x:2x2x1
jax: 0.10.0
libtpu: 0.0.40
codegen_flags: <defaults>
</compile_context>

<pallas_src>
import jax
import jax.numpy as jnp
from jax.experimental import pallas as pl
from jax.experimental.pallas import tpu as pltpu


def _cdiv(a, b):
    return -(-a // b)


def _round_up(v, m):
    return ((v + m - 1) // m) * m


def _make_sisdr_kernel(t_len, tt, eps, tail_mask):
    """Kernel factory; t_len / tt / eps / tail_mask are trace-time constants."""

    def kernel(inp_ref, tgt_ref, sdr_ref, rss_acc, rst_acc, sii_acc):
        # inp_ref / tgt_ref: (TB, TT) native dtype; sdr_ref / accs: (TB, 1) f32.
        k = pl.program_id(1)
        last_k = pl.num_programs(1) - 1

        @pl.when(k == 0)
        def _init():
            rss_acc[...] = jnp.zeros_like(rss_acc)
            rst_acc[...] = jnp.zeros_like(rst_acc)
            sii_acc[...] = jnp.zeros_like(sii_acc)

        def load_f32():
            return (inp_ref[...].astype(jnp.float32),
                    tgt_ref[...].astype(jnp.float32))

        def accumulate(x, t):
            rss_acc[...] += jnp.sum(t * t, axis=-1, keepdims=True)
            rst_acc[...] += jnp.sum(t * x, axis=-1, keepdims=True)
            sii_acc[...] += jnp.sum(x * x, axis=-1, keepdims=True)

        if tail_mask:
            # Only the last k block runs past T; keep the hot path unmasked.
            @pl.when(k < last_k)
            def _body():
                accumulate(*load_f32())

            @pl.when(k == last_k)
            def _tail():
                x, t = load_f32()
                col = k * tt + jax.lax.broadcasted_iota(jnp.int32, x.shape, 1)
                valid = col < t_len
                accumulate(jnp.where(valid, x, 0.0), jnp.where(valid, t, 0.0))
        else:
            accumulate(*load_f32())

        @pl.when(k == last_k)
        def _finalize():
            e = jnp.float32(eps)
            rss = rss_acc[...]
            rst = rst_acc[...]
            sii = sii_acc[...]
            a = (rst + e) / (rss + e)
            sss = a * a * rss
            # One-pass expansion of sum((x - a*t)^2); clamp so f32 cancellation
            # at very high SDR cannot push it below 0 (-> NaN in log10).
            # TODO(synk): a second streamed residual pass would be needed for
            # bit-faithfulness to torch on near-perfect (very high SDR) rows.
            snn = jnp.maximum(sii - 2.0 * a * rst + a * a * rss, 0.0)
            sdr_ref[...] = 10.0 * jnp.log10((sss + e) / (snn + e))

    return kernel


def pallas_si_sdr(input, target, *, tb_max=256, tt_max=8192):
    """Per-row SI-SDR (dB). input/target: float arrays of shape (..., T)."""
    t_len = input.shape[-1]

    # eps follows torch.finfo(input.dtype).eps (dtype-dependent, like PyTorch).
    in_dtype = input.dtype if jnp.issubdtype(input.dtype, jnp.floating) else jnp.float32
    eps = float(jnp.finfo(in_dtype).eps)

    x = input.reshape(-1, t_len)
    y = target.reshape(-1, t_len)
    if not jnp.issubdtype(x.dtype, jnp.floating):
        x = x.astype(jnp.float32)
    y = y.astype(x.dtype)
    b = x.shape[0]
    itemsize = x.dtype.itemsize
    sub = 16 if itemsize == 2 else 8          # sublane packing for 16-bit dtypes
    lane = 128

    # ---- row tiling ('parallel' axis) ----
    if b <= sub:
        tb = b                                 # full-dim block: always legal
    else:
        tb = min(_round_up(tb_max, sub), _round_up(b, sub))
        if b >= 2 * sub:
            # >= 2 row blocks so both v7x TensorCores stream (no-op on v5e/v6e).
            tb = min(tb, _round_up(_cdiv(b, 2), sub))

    # ---- time tiling ('arbitrary' reduction axis, last in grid) ----
    if t_len <= lane:
        tt = t_len                             # full-dim block: always legal
    else:
        tt = min(_round_up(tt_max, lane), _round_up(t_len, lane))

    # ---- size the double-buffered footprint against this chip's VMEM ----
    try:
        vmem_cap = int(pltpu.get_tpu_info().vmem_capacity_bytes)
    except Exception:
        vmem_cap = 64 * 1024 * 1024            # conservative (v7x per-core)
    input_budget = min(vmem_cap // 2, 48 * 1024 * 1024)
    if t_len > lane:
        # 2 inputs x 2 pipeline buffers x (tb * tt) elements must fit the budget.
        max_tt = max(lane, (input_budget // (4 * tb * itemsize)) // lane * lane)
        tt = min(tt, max_tt)

    grid = (_cdiv(b, tb), _cdiv(t_len, tt))
    tail_mask = (t_len % tt) != 0

    footprint = 4 * tb * tt * itemsize         # double-buffered inputs
    footprint += 2 * tb * lane * 4             # output block (lane-padded), x2
    footprint += 3 * tb * lane * 4             # (tb, 1) f32 accumulators (lane-padded)
    vmem_limit = int(min(vmem_cap, max(footprint + (8 << 20), 32 << 20)))

    kernel = _make_sisdr_kernel(t_len, tt, eps, tail_mask)

    sdr = pl.pallas_call(
        kernel,
        out_shape=jax.ShapeDtypeStruct((b, 1), jnp.float32),
        grid=grid,
        in_specs=[
            pl.BlockSpec((tb, tt), lambda i, k: (i, k)),
            pl.BlockSpec((tb, tt), lambda i, k: (i, k)),
        ],
        out_specs=pl.BlockSpec((tb, 1), lambda i, k: (i, 0)),
        scratch_shapes=[pltpu.VMEM((tb, 1), jnp.float32)] * 3,
        compiler_params=pltpu.CompilerParams(
            dimension_semantics=("parallel", "arbitrary"),
            vmem_limit_bytes=vmem_limit,
        ),
    )(x, y)

    return sdr[:, 0]


def pallas_sdr_loss(input, target, factor=0.2, **tile_kwargs):
    """SdrLoss.forward: -mean(SiSdr(input, target)) * factor (scalar)."""
    if factor == 0:
        return jnp.zeros((), dtype=jnp.float32)
    sdr = pallas_si_sdr(input, target, **tile_kwargs)
    return -jnp.mean(sdr) * jnp.float32(factor)


def _reference_sdr_loss(input, target, factor=0.2):
    # Pure-JAX transcription of the PyTorch module (two-pass residual form).
    in_dtype = input.dtype if jnp.issubdtype(input.dtype, jnp.floating) else jnp.float32
    eps = jnp.float32(jnp.finfo(in_dtype).eps)
    t = input.shape[-1]
    x = input.reshape(-1, t).astype(jnp.float32)
    y = target.reshape(-1, t).astype(jnp.float32)
    rss = jnp.sum(y * y, axis=-1, keepdims=True)
    a = (jnp.sum(y * x, axis=-1, keepdims=True) + eps) / (rss + eps)
    e_true = a * y
    e_res = x - e_true
    sss = jnp.sum(e_true * e_true, axis=-1)
    snn = jnp.sum(e_res * e_res, axis=-1)
    sdr = 10.0 * jnp.log10((sss + eps) / (snn + eps))
    return -jnp.mean(sdr) * jnp.float32(factor)


if __name__ == "__main__":
    key = jax.random.PRNGKey(0)
    k1, k2 = jax.random.split(key)

    # Small deterministic test: (B, C, T) signals, noisy estimate vs. target.
    B, C, T = 2, 4, 1500   # T not a multiple of 128 -> exercises the tail mask
    target = jax.random.normal(k1, (B, C, T), dtype=jnp.float32)
    noise = 0.3 * jax.random.normal(k2, (B, C, T), dtype=jnp.float32)
    inp = target + noise

    # Small tile caps -> several k steps + a masked tail block.
    loss_small = pallas_sdr_loss(inp, target, factor=0.2, tb_max=8, tt_max=256)
    loss_small = jax.block_until_ready(loss_small)
    # Default (large-tile) config -> single masked block along k.
    loss_big = jax.block_until_ready(pallas_sdr_loss(inp, target, factor=0.2))

    ref = _reference_sdr_loss(inp, target, factor=0.2)
    for loss in (loss_small, loss_big):
        assert loss.shape == () and loss.dtype == jnp.float32, (loss.shape, loss.dtype)
        assert jnp.allclose(loss, ref, atol=1e-4, rtol=1e-4), (float(loss), float(ref))

    # bf16 inputs stream 16-bit through HBM and upcast per-tile in the kernel;
    # eps follows the input dtype (torch.finfo semantics).
    inp16 = inp.astype(jnp.bfloat16)
    tgt16 = target.astype(jnp.bfloat16)
    loss16 = jax.block_until_ready(pallas_sdr_loss(inp16, tgt16, factor=0.2, tt_max=512))
    ref16 = _reference_sdr_loss(inp16, tgt16, factor=0.2)
    assert jnp.allclose(loss16, ref16, atol=1e-2, rtol=1e-2), (float(loss16), float(ref16))

    # factor == 0 short-circuit (SdrLoss semantics).
    zero = pallas_sdr_loss(inp, target, factor=0.0)
    assert zero.shape == () and float(zero) == 0.0

    print("KERNEL_OK")
</pallas_src>

<mosaic_0001>
module attributes {stable_mosaic.version = 11 : i64} {
  func.func @kernel(%arg0: i32, %arg1: i32, %arg2: memref<8x256xf32, #tpu.memory_space<vmem>>, %arg3: memref<8x256xf32, #tpu.memory_space<vmem>>, %arg4: memref<8x1xf32, #tpu.memory_space<vmem>>, %arg5: memref<8x1xf32, #tpu.memory_space<vmem>>, %arg6: memref<8x1xf32, #tpu.memory_space<vmem>>, %arg7: memref<8x1xf32, #tpu.memory_space<vmem>>) attributes {dimension_semantics = [#tpu.dimension_semantics<parallel>, #tpu.dimension_semantics<arbitrary>], iteration_bounds = array<i64: 1, 6>, scalar_prefetch = 0 : i64, scratch_operands = 3 : i64, tpu.core_type = #tpu.core_type<tc>, window_params = [{transform_indices = @transform_0, window_bounds = array<i64: 8, 256>}, {transform_indices = @transform_1, window_bounds = array<i64: 8, 256>}, {transform_indices = @transform_2, window_bounds = array<i64: 8, 1>}]} {
    %c0_i32 = arith.constant 0 : i32
    %0 = arith.cmpi eq, %arg1, %c0_i32 : i32
    %1 = arith.extui %0 : i1 to i32
    %c0_i32_0 = arith.constant 0 : i32
    %2 = arith.cmpi ne, %1, %c0_i32_0 : i32
    scf.if %2 {
      %cst = arith.constant 0.000000e+00 : f32
      %12 = vector.broadcast %cst : f32 to vector<8x1xf32>
      %c0 = arith.constant 0 : index
      %c0_6 = arith.constant 0 : index
      %13 = vector.load %arg5[%c0, %c0_6] : memref<8x1xf32, #tpu.memory_space<vmem>>, vector<8x1xf32>
      tpu.vector_store %arg5[%c0, %c0_6], %12 {strides = array<i32>} : memref<8x1xf32, #tpu.memory_space<vmem>>, vector<8x1xf32>,
      %cst_7 = arith.constant 0.000000e+00 : f32
      %14 = vector.broadcast %cst_7 : f32 to vector<8x1xf32>
      %c0_8 = arith.constant 0 : index
      %c0_9 = arith.constant 0 : index
      %15 = vector.load %arg6[%c0_8, %c0_9] : memref<8x1xf32, #tpu.memory_space<vmem>>, vector<8x1xf32>
      tpu.vector_store %arg6[%c0_8, %c0_9], %14 {strides = array<i32>} : memref<8x1xf32, #tpu.memory_space<vmem>>, vector<8x1xf32>,
      %cst_10 = arith.constant 0.000000e+00 : f32
      %16 = vector.broadcast %cst_10 : f32 to vector<8x1xf32>
      %c0_11 = arith.constant 0 : index
      %c0_12 = arith.constant 0 : index
      %17 = vector.load %arg7[%c0_11, %c0_12] : memref<8x1xf32, #tpu.memory_space<vmem>>, vector<8x1xf32>
      tpu.vector_store %arg7[%c0_11, %c0_12], %16 {strides = array<i32>} : memref<8x1xf32, #tpu.memory_space<vmem>>, vector<8x1xf32>,
    } else {
    }
    %c5_i32 = arith.constant 5 : i32
    %3 = arith.cmpi slt, %arg1, %c5_i32 : i32
    %4 = arith.extui %3 : i1 to i32
    %c0_i32_1 = arith.constant 0 : i32
    %5 = arith.cmpi ne, %4, %c0_i32_1 : i32
    scf.if %5 {
      %c0 = arith.constant 0 : index
      %c0_6 = arith.constant 0 : index
      %12 = vector.load %arg2[%c0, %c0_6] : memref<8x256xf32, #tpu.memory_space<vmem>>, vector<8x256xf32>
      %c0_7 = arith.constant 0 : index
      %c0_8 = arith.constant 0 : index
      %13 = vector.load %arg3[%c0_7, %c0_8] : memref<8x256xf32, #tpu.memory_space<vmem>>, vector<8x256xf32>
      %c0_9 = arith.constant 0 : index
      %c0_10 = arith.constant 0 : index
      %14 = vector.load %arg5[%c0_9, %c0_10] : memref<8x1xf32, #tpu.memory_space<vmem>>, vector<8x1xf32>
      %15 = arith.mulf %13, %13 : vector<8x256xf32>
      %cst = arith.constant dense<0.000000e+00> : vector<8xf32>
      %16 = vector.multi_reduction <add>, %15, %cst [1] : vector<8x256xf32> to vector<8xf32>
      %17 = vector.shape_cast %16 : vector<8xf32> to vector<8x1xf32>
      %18 = arith.addf %14, %17 : vector<8x1xf32>
      %c0_11 = arith.constant 0 : index
      %c0_12 = arith.constant 0 : index
      %19 = vector.load %arg5[%c0_11, %c0_12] : memref<8x1xf32, #tpu.memory_space<vmem>>, vector<8x1xf32>
      tpu.vector_store %arg5[%c0_11, %c0_12], %18 {strides = array<i32>} : memref<8x1xf32, #tpu.memory_space<vmem>>, vector<8x1xf32>,
      %c0_13 = arith.constant 0 : index
      %c0_14 = arith.constant 0 : index
      %20 = vector.load %arg6[%c0_13, %c0_14] : memref<8x1xf32, #tpu.memory_space<vmem>>, vector<8x1xf32>
      %21 = arith.mulf %13, %12 : vector<8x256xf32>
      %cst_15 = arith.constant dense<0.000000e+00> : vector<8xf32>
      %22 = vector.multi_reduction <add>, %21, %cst_15 [1] : vector<8x256xf32> to vector<8xf32>
      %23 = vector.shape_cast %22 : vector<8xf32> to vector<8x1xf32>
      %24 = arith.addf %20, %23 : vector<8x1xf32>
      %c0_16 = arith.constant 0 : index
      %c0_17 = arith.constant 0 : index
      %25 = vector.load %arg6[%c0_16, %c0_17] : memref<8x1xf32, #tpu.memory_space<vmem>>, vector<8x1xf32>
      tpu.vector_store %arg6[%c0_16, %c0_17], %24 {strides = array<i32>} : memref<8x1xf32, #tpu.memory_space<vmem>>, vector<8x1xf32>,
      %c0_18 = arith.constant 0 : index
      %c0_19 = arith.constant 0 : index
      %26 = vector.load %arg7[%c0_18, %c0_19] : memref<8x1xf32, #tpu.memory_space<vmem>>, vector<8x1xf32>
      %27 = arith.mulf %12, %12 : vector<8x256xf32>
      %cst_20 = arith.constant dense<0.000000e+00> : vector<8xf32>
      %28 = vector.multi_reduction <add>, %27, %cst_20 [1] : vector<8x256xf32> to vector<8xf32>
      %29 = vector.shape_cast %28 : vector<8xf32> to vector<8x1xf32>
      %30 = arith.addf %26, %29 : vector<8x1xf32>
      %c0_21 = arith.constant 0 : index
      %c0_22 = arith.constant 0 : index
      %31 = vector.load %arg7[%c0_21, %c0_22] : memref<8x1xf32, #tpu.memory_space<vmem>>, vector<8x1xf32>
      tpu.vector_store %arg7[%c0_21, %c0_22], %30 {strides = array<i32>} : memref<8x1xf32, #tpu.memory_space<vmem>>, vector<8x1xf32>,
    } else {
    }
    %c5_i32_2 = arith.constant 5 : i32
    %6 = arith.cmpi eq, %arg1, %c5_i32_2 : i32
    %7 = arith.extui %6 : i1 to i32
    %c0_i32_3 = arith.constant 0 : i32
    %8 = arith.cmpi ne, %7, %c0_i32_3 : i32
    scf.if %8 {
      %c0 = arith.constant 0 : index
      %c0_6 = arith.constant 0 : index
      %12 = vector.load %arg2[%c0, %c0_6] : memref<8x256xf32, #tpu.memory_space<vmem>>, vector<8x256xf32>
      %c0_7 = arith.constant 0 : index
      %c0_8 = arith.constant 0 : index
      %13 = vector.load %arg3[%c0_7, %c0_8] : memref<8x256xf32, #tpu.memory_space<vmem>>, vector<8x256xf32>
      %c256_i32 = arith.constant 256 : i32
      %14 = arith.muli %arg1, %c256_i32 : i32
      %15 = tpu.iota {dimensions = array<i32: 1>} : vector<8x256xi32>
      %16 = vector.broadcast %14 : i32 to vector<8x256xi32>
      %17 = arith.addi %16, %15 : vector<8x256xi32>
      %c1500_i32 = arith.constant 1500 : i32
      %18 = vector.broadcast %c1500_i32 : i32 to vector<8x256xi32>
      %19 = arith.cmpi slt, %17, %18 : vector<8x256xi32>
      %cst = arith.constant 0.000000e+00 : f32
      %20 = vector.broadcast %cst : f32 to vector<8x256xf32>
      %21 = arith.select %19, %12, %20 : vector<8x256xi1>, vector<8x256xf32>
      %cst_9 = arith.constant 0.000000e+00 : f32
      %22 = vector.broadcast %cst_9 : f32 to vector<8x256xf32>
      %23 = arith.select %19, %13, %22 : vector<8x256xi1>, vector<8x256xf32>
      %c0_10 = arith.constant 0 : index
      %c0_11 = arith.constant 0 : index
      %24 = vector.load %arg5[%c0_10, %c0_11] : memref<8x1xf32, #tpu.memory_space<vmem>>, vector<8x1xf32>
      %25 = arith.mulf %23, %23 : vector<8x256xf32>
      %cst_12 = arith.constant dense<0.000000e+00> : vector<8xf32>
      %26 = vector.multi_reduction <add>, %25, %cst_12 [1] : vector<8x256xf32> to vector<8xf32>
      %27 = vector.shape_cast %26 : vector<8xf32> to vector<8x1xf32>
      %28 = arith.addf %24, %27 : vector<8x1xf32>
      %c0_13 = arith.constant 0 : index
      %c0_14 = arith.constant 0 : index
      %29 = vector.load %arg5[%c0_13, %c0_14] : memref<8x1xf32, #tpu.memory_space<vmem>>, vector<8x1xf32>
      tpu.vector_store %arg5[%c0_13, %c0_14], %28 {strides = array<i32>} : memref<8x1xf32, #tpu.memory_space<vmem>>, vector<8x1xf32>,
      %c0_15 = arith.constant 0 : index
      %c0_16 = arith.constant 0 : index
      %30 = vector.load %arg6[%c0_15, %c0_16] : memref<8x1xf32, #tpu.memory_space<vmem>>, vector<8x1xf32>
      %31 = arith.mulf %23, %21 : vector<8x256xf32>
      %cst_17 = arith.constant dense<0.000000e+00> : vector<8xf32>
      %32 = vector.multi_reduction <add>, %31, %cst_17 [1] : vector<8x256xf32> to vector<8xf32>
      %33 = vector.shape_cast %32 : vector<8xf32> to vector<8x1xf32>
      %34 = arith.addf %30, %33 : vector<8x1xf32>
      %c0_18 = arith.constant 0 : index
      %c0_19 = arith.constant 0 : index
      %35 = vector.load %arg6[%c0_18, %c0_19] : memref<8x1xf32, #tpu.memory_space<vmem>>, vector<8x1xf32>
      tpu.vector_store %arg6[%c0_18, %c0_19], %34 {strides = array<i32>} : memref<8x1xf32, #tpu.memory_space<vmem>>, vector<8x1xf32>,
      %c0_20 = arith.constant 0 : index
      %c0_21 = arith.constant 0 : index
      %36 = vector.load %arg7[%c0_20, %c0_21] : memref<8x1xf32, #tpu.memory_space<vmem>>, vector<8x1xf32>
      %37 = arith.mulf %21, %21 : vector<8x256xf32>
      %cst_22 = arith.constant dense<0.000000e+00> : vector<8xf32>
      %38 = vector.multi_reduction <add>, %37, %cst_22 [1] : vector<8x256xf32> to vector<8xf32>
      %39 = vector.shape_cast %38 : vector<8xf32> to vector<8x1xf32>
      %40 = arith.addf %36, %39 : vector<8x1xf32>
      %c0_23 = arith.constant 0 : index
      %c0_24 = arith.constant 0 : index
      %41 = vector.load %arg7[%c0_23, %c0_24] : memref<8x1xf32, #tpu.memory_space<vmem>>, vector<8x1xf32>
      tpu.vector_store %arg7[%c0_23, %c0_24], %40 {strides = array<i32>} : memref<8x1xf32, #tpu.memory_space<vmem>>, vector<8x1xf32>,
    } else {
    }
    %c5_i32_4 = arith.constant 5 : i32
    %9 = arith.cmpi eq, %arg1, %c5_i32_4 : i32
    %10 = arith.extui %9 : i1 to i32
    %c0_i32_5 = arith.constant 0 : i32
    %11 = arith.cmpi ne, %10, %c0_i32_5 : i32
    scf.if %11 {
      %c0 = arith.constant 0 : index
      %c0_6 = arith.constant 0 : index
      %12 = vector.load %arg5[%c0, %c0_6] : memref<8x1xf32, #tpu.memory_space<vmem>>, vector<8x1xf32>
      %c0_7 = arith.constant 0 : index
      %c0_8 = arith.constant 0 : index
      %13 = vector.load %arg6[%c0_7, %c0_8] : memref<8x1xf32, #tpu.memory_space<vmem>>, vector<8x1xf32>
      %c0_9 = arith.constant 0 : index
      %c0_10 = arith.constant 0 : index
      %14 = vector.load %arg7[%c0_9, %c0_10] : memref<8x1xf32, #tpu.memory_space<vmem>>, vector<8x1xf32>
      %cst = arith.constant 1.1920929E-7 : f32
      %15 = vector.broadcast %cst : f32 to vector<8x1xf32>
      %16 = arith.addf %13, %15 : vector<8x1xf32>
      %cst_11 = arith.constant 1.1920929E-7 : f32
      %17 = vector.broadcast %cst_11 : f32 to vector<8x1xf32>
      %18 = arith.addf %12, %17 : vector<8x1xf32>
      %19 = arith.divf %16, %18 : vector<8x1xf32>
      %20 = arith.mulf %19, %19 : vector<8x1xf32>
      %21 = arith.mulf %20, %12 : vector<8x1xf32>
      %cst_12 = arith.constant 2.000000e+00 : f32
      %22 = vector.broadcast %cst_12 : f32 to vector<8x1xf32>
      %23 = arith.mulf %22, %19 : vector<8x1xf32>
      %24 = arith.mulf %23, %13 : vector<8x1xf32>
      %25 = arith.subf %14, %24 : vector<8x1xf32>
      %26 = arith.mulf %19, %19 : vector<8x1xf32>
      %27 = arith.mulf %26, %12 : vector<8x1xf32>
      %28 = arith.addf %25, %27 : vector<8x1xf32>
      %cst_13 = arith.constant 0.000000e+00 : f32
      %29 = vector.broadcast %cst_13 : f32 to vector<8x1xf32>
      %30 = arith.maximumf %28, %29 : vector<8x1xf32>
      %cst_14 = arith.constant 1.1920929E-7 : f32
      %31 = vector.broadcast %cst_14 : f32 to vector<8x1xf32>
      %32 = arith.addf %21, %31 : vector<8x1xf32>
      %cst_15 = arith.constant 1.1920929E-7 : f32
      %33 = vector.broadcast %cst_15 : f32 to vector<8x1xf32>
      %34 = arith.addf %30, %33 : vector<8x1xf32>
      %35 = arith.divf %32, %34 : vector<8x1xf32>
      %36 = math.log %35 : vector<8x1xf32>
      %cst_16 = arith.constant 0.434294492 : f32
      %37 = vector.broadcast %cst_16 : f32 to vector<8x1xf32>
      %38 = arith.mulf %36, %37 : vector<8x1xf32>
      %cst_17 = arith.constant 1.000000e+01 : f32
      %39 = vector.broadcast %cst_17 : f32 to vector<8x1xf32>
      %40 = arith.mulf %39, %38 : vector<8x1xf32>
      %c0_18 = arith.constant 0 : index
      %c0_19 = arith.constant 0 : index
      %41 = vector.load %arg4[%c0_18, %c0_19] : memref<8x1xf32, #tpu.memory_space<vmem>>, vector<8x1xf32>
      tpu.vector_store %arg4[%c0_18, %c0_19], %40 {strides = array<i32>} : memref<8x1xf32, #tpu.memory_space<vmem>>, vector<8x1xf32>,
    } else {
    }
    return
  }
  func.func @transform_0(%arg0: i32, %arg1: i32) -> (i32, i32) {
    %c0_i32 = arith.constant 0 : i32
    return %arg0, %arg1 : i32, i32
  }
  func.func @transform_1(%arg0: i32, %arg1: i32) -> (i32, i32) {
    %c0_i32 = arith.constant 0 : i32
    return %arg0, %arg1 : i32, i32
  }
  func.func @transform_2(%arg0: i32, %arg1: i32) -> (i32, i32) {
    %c0_i32 = arith.constant 0 : i32
    %c0_i32_0 = arith.constant 0 : i32
    return %arg0, %c0_i32 : i32, i32
  }
}

</mosaic_0001>

<llo_original>
// kernel: tpu_custom_call.1
$region0: #{tpu_custom_call.1}
  #allocation0 [shape = 'u32[]', space=smem, size = 0x4, offset = 0x4, fixed_abs, tag = 'smem constant byte address 0x4 - core index']
  #allocation1 [shape = 'u32[144,128]{1,0:T(1,128)}', space=vmem, size = 0x12000, scoped, tag = 'internal scratch']
  #allocation2 [shape = 'f32[8,1]{1,0:T(8,128)}', space=vmem, size = 0x1000, scoped, tag = 'scratch operand']
  #allocation3 [shape = 'f32[8,1]{1,0:T(8,128)}', space=vmem, size = 0x1000, scoped, tag = 'scratch operand']
  #allocation4 [shape = 'f32[8,1]{1,0:T(8,128)}', space=vmem, size = 0x1000, scoped, tag = 'scratch operand']
  %s0 = inlined_call_operand.hbm [shape: f32[8,1500], index: 0, kind: input, shape index: {}]
  %s1 = inlined_call_operand.hbm [shape: f32[8,1500], index: 1, kind: input, shape index: {}]
  %s2 = inlined_call_operand.vmem [shape: f32[8,1], index: 2, kind: output, shape index: {}]
  %s3 = sld [smem:[#allocation0]]
  $region61: #{tpu_custom_call.1} parent=0
    _
  %s5 = ssub.s32 1, %s3
  %s6 = scalar_select 0, %s5, %s3
  $region1: #{tpu_custom_call.1} parent=0
    #allocation5 [shape = 'u8[16384]{0}', space=vmem, size = 0x4000, scoped, tag = 'input window, operand 0']
    #allocation6 [shape = 's32[2]{0}', space=sflag, size = 0x8, scoped, tag = 'scoped memory for tpu_custom_call.1']
    #allocation7 [shape = 'u8[16384]{0}', space=vmem, size = 0x4000, scoped, tag = 'input window, operand 1']
    #allocation8 [shape = 's32[2]{0}', space=sflag, size = 0x8, scoped, tag = 'scoped memory for tpu_custom_call.1']
    %7 = vsyncpa [#allocation6], 0
    %s8 = scalar_lea.sflag [#allocation6], 1
    %9 = vsyncpa %s8, 0
    %10 = vsyncpa [#allocation8], 0
    %s11 = scalar_lea.sflag [#allocation8], 1
    %12 = vsyncpa %s11, 0
    loop: start=0, step=1, limit=8
    $region2: #{tpu_custom_call.1} parent=1 // loop_pre_header
      _
    $region3: #{tpu_custom_call.1} parent=1 // loop_header
      %s14 = sphi 0, %s18
      %p15 = scmp.ge.s32.totalorder %s14, 8
      %s21 = sphi 0, %s33
      %s22 = sphi 0, %s29
      %s23 = sphi 0, %s21
      %s24 = sphi 0, %s22
      %s25 = sphi 0, %s23
      %s26 = sphi 0, %s24
      %s38 = sphi 0, %s40
      %s41 = sphi 0, %s38
      %s42 = sphi 0, %s41
      %s58 = sphi 0, %s42
      %s66 = sphi 0, %s68
      %s69 = sphi 0, %s66
      %s70 = sphi 0, %s69
      %s86 = sphi 0, %s70
      %s92 = sphi 0, %s94
      %s95 = sphi 0, %s92
      %s96 = sphi 0, %s95
      %s112 = sphi 0, %s96
    $region4: #{tpu_custom_call.1} parent=1 // loop_header_branch
      %17 = sbr.rel (%p15) target = $region8
    $region5: #{tpu_custom_call.1} parent=1 // loop_body
      %s19 = ssub.s32 %s14, 1
      %s20 = ssub.s32 %s14, 2
      %s27 = sadd.s32 1, %s22
      %p28 = scmp.ge.s32.totalorder %s27, 6
      %s29 = scalar_select %p28, 0, %s27
      %s30 = sadd.s32 1, %s21
      %s31 = scalar_select %p28, %s30, %s21
      %p32 = scmp.ge.s32.totalorder %s31, 1
      %s33 = scalar_select %p32, 0, %s31
      %s34 = ssub.s32 %s21, %s33
      %s35 = ssub.s32 %s22, %s29
      %s36 = sor.u32 %s34, %s35
      %p37 = scmp.eq.s32.totalorder %s36, 0
      %s39 = sadd.s32 %s38, 1
      %s40 = scalar_select %p37, %s38, %s39
      %p43 = pneg %p37
      %p44 = scmp.eq.s32.totalorder %s14, 5
      %p45 = por %p43, %p44
      %p46 = scmp.ne.s32.totalorder %s38, %s41
      %p47 = scmp.eq.s32.totalorder %s14, 0
      %p48 = por %p46, %p47
      %p49 = scmp.ne.s32.totalorder %s38, %s41
      %p50 = scmp.eq.s32.totalorder %s19, 5
      %p51 = por %p49, %p50
      %p52 = scmp.ne.s32.totalorder %s41, %s42
      %p53 = scmp.eq.s32.totalorder %s19, 0
      %p54 = por %p52, %p53
      %p55 = scmp.ne.s32.totalorder %s41, %s42
      %p56 = scmp.eq.s32.totalorder %s20, 5
      %p57 = por %p55, %p56
      %p59 = scmp.ne.s32.totalorder %s42, %s58
      %p60 = scmp.eq.s32.totalorder %s20, 0
      %p61 = por %p59, %p60
      %s62 = ssub.s32 %s21, %s33
      %s63 = ssub.s32 %s22, %s29
      %s64 = sor.u32 %s62, %s63
      %p65 = scmp.eq.s32.totalorder %s64, 0
      %s67 = sadd.s32 %s66, 1
      %s68 = scalar_select %p65, %s66, %s67
      %p71 = pneg %p65
      %p72 = scmp.eq.s32.totalorder %s14, 5
      %p73 = por %p71, %p72
      %p74 = scmp.ne.s32.totalorder %s66, %s69
      %p75 = scmp.eq.s32.totalorder %s14, 0
      %p76 = por %p74, %p75
      %p77 = scmp.ne.s32.totalorder %s66, %s69
      %p78 = scmp.eq.s32.totalorder %s19, 5
      %p79 = por %p77, %p78
      %p80 = scmp.ne.s32.totalorder %s69, %s70
      %p81 = scmp.eq.s32.totalorder %s19, 0
      %p82 = por %p80, %p81
      %p83 = scmp.ne.s32.totalorder %s69, %s70
      %p84 = scmp.eq.s32.totalorder %s20, 5
      %p85 = por %p83, %p84
      %p87 = scmp.ne.s32.totalorder %s70, %s86
      %p88 = scmp.eq.s32.totalorder %s20, 0
      %p89 = por %p87, %p88
      %s90 = ssub.s32 %s21, %s33
      %p91 = scmp.eq.s32.totalorder %s90, 0
      %s93 = sadd.s32 %s92, 1
      %s94 = scalar_select %p91, %s92, %s93
      %p97 = pneg %p91
      %p98 = scmp.eq.s32.totalorder %s14, 5
      %p99 = por %p97, %p98
      %p100 = scmp.ne.s32.totalorder %s92, %s95
      %p101 = scmp.eq.s32.totalorder %s14, 0
      %p102 = por %p100, %p101
      %p103 = scmp.ne.s32.totalorder %s92, %s95
      %p104 = scmp.eq.s32.totalorder %s19, 5
      %p105 = por %p103, %p104
      %p106 = scmp.ne.s32.totalorder %s95, %s96
      %p107 = scmp.eq.s32.totalorder %s19, 0
      %p108 = por %p106, %p107
      %p109 = scmp.ne.s32.totalorder %s95, %s96
      %p110 = scmp.eq.s32.totalorder %s20, 5
      %p111 = por %p109, %p110
      %p113 = scmp.ne.s32.totalorder %s96, %s112
      %p114 = scmp.eq.s32.totalorder %s20, 0
      %p115 = por %p113, %p114
      %p116 = scmp.le.s32.totalorder 1, %s14
      %p117 = scmp.lt.s32.totalorder %s14, 7
      %p118 = pnand %p116, %p117
      %p119 = pneg %p118
      // Predicated region
      $region9: #{tpu_custom_call.1} parent=5 // pred_check
        _
      $region10: #{tpu_custom_call.1} parent=5 // pred_check_branch
        %121 = sbr.rel (%p118) target = $region12
      $region11: #{tpu_custom_call.1} parent=5 // pred_region
        %s122 = ssub.s32 %s14, 1
      $region12: #{tpu_custom_call.1} parent=5 // pred_fallthru
        _
      %p123 = scmp.lt.s32.totalorder %s14, 6
      // Predicated region
      $region13: #{tpu_custom_call.1} parent=5 // pred_check
        %p124 = pneg %p123
      $region14: #{tpu_custom_call.1} parent=5 // pred_check_branch
        %126 = sbr.rel (%p124) target = $region16
      $region15: #{tpu_custom_call.1} parent=5 // pred_region
        // Predicated region
        $region17: #{tpu_custom_call.1} parent=15 // pred_check
          %p127 = pneg %p48
        $region18: #{tpu_custom_call.1} parent=15 // pred_check_branch
          %129 = sbr.rel (%p127) target = $region20
        $region19: #{tpu_custom_call.1} parent=15 // pred_region
          %s130 = sand.u32 %s38, 1
          %s131 = scalar_lea.sflag [#allocation6], %s130
          %s132 = sand.u32 %s38, 1
          %s133 = smul.addr %s132, 16
          %s134 = scalar_lea.vmem [#allocation5], %s133
          %s135 = smul.u32 2, %s22
          %s137 = ssub.s32 256, 256
          %138 = vsyncadd %s131, %s137
          %s139 = smul.addr %s21, 12
          %s140 = sadd.s32 %s135, %s139
          %s141 = smul.addr %s140, 128
          %s142 = scalar_lea.hbm %s0, %s141
          %s144 = sshll.u32 %s134, 4
          %s145 = int_to_ptr.vmem [resolvable:$true] %s144
          %147 = dma.hbm_to_vmem [thread:$0]  %s142, 256, %s145, %s131
        $region20: #{tpu_custom_call.1} parent=15 // pred_fallthru
          _
        // Predicated region
        $region21: #{tpu_custom_call.1} parent=15 // pred_check
          %p148 = pneg %p76
        $region22: #{tpu_custom_call.1} parent=15 // pred_check_branch
          %150 = sbr.rel (%p148) target = $region24
        $region23: #{tpu_custom_call.1} parent=15 // pred_region
          %s151 = sand.u32 %s66, 1
          %s152 = scalar_lea.sflag [#allocation8], %s151
          %s153 = sand.u32 %s66, 1
          %s154 = smul.addr %s153, 16
          %s155 = scalar_lea.vmem [#allocation7], %s154
          %s156 = smul.u32 2, %s22
          %s158 = ssub.s32 256, 256
          %159 = vsyncadd %s152, %s158
          %s160 = smul.addr %s21, 12
          %s161 = sadd.s32 %s156, %s160
          %s162 = smul.addr %s161, 128
          %s163 = scalar_lea.hbm %s1, %s162
          %s165 = sshll.u32 %s155, 4
          %s166 = int_to_ptr.vmem [resolvable:$true] %s165
          %168 = dma.hbm_to_vmem [thread:$0]  %s163, 256, %s166, %s152
        $region24: #{tpu_custom_call.1} parent=15 // pred_fallthru
          _
      $region16: #{tpu_custom_call.1} parent=5 // pred_fallthru
        _
      %p169 = scmp.le.s32.totalorder 1, %s14
      %p170 = scmp.lt.s32.totalorder %s14, 7
      %p171 = pnand %p169, %p170
      %p172 = pneg %p171
      // Predicated region
      $region25: #{tpu_custom_call.1} parent=5 // pred_check
        _
      $region26: #{tpu_custom_call.1} parent=5 // pred_check_branch
        %174 = sbr.rel (%p171) target = $region28
      $region27: #{tpu_custom_call.1} parent=5 // pred_region
        %s175 = ssub.s32 %s14, 1
        %s176 = sand.u32 %s41, 1
        %s177 = scalar_lea.sflag [#allocation6], %s176
        %s178 = sand.u32 %s41, 1
        %s179 = smul.addr %s178, 16
        %s180 = scalar_lea.vmem [#allocation5], %s179
        // Predicated region
        $region29: #{tpu_custom_call.1} parent=27 // pred_check
          %p181 = pneg %p54
        $region30: #{tpu_custom_call.1} parent=27 // pred_check_branch
          %183 = sbr.rel (%p181) target = $region32
        $region31: #{tpu_custom_call.1} parent=27 // pred_region
          %184 = dma.done %s177, 256
        $region32: #{tpu_custom_call.1} parent=27 // pred_fallthru
          _
        %s185 = sand.u32 %s69, 1
        %s186 = scalar_lea.sflag [#allocation8], %s185
        %s187 = sand.u32 %s69, 1
        %s188 = smul.addr %s187, 16
        %s189 = scalar_lea.vmem [#allocation7], %s188
        // Predicated region
        $region33: #{tpu_custom_call.1} parent=27 // pred_check
          %p190 = pneg %p82
        $region34: #{tpu_custom_call.1} parent=27 // pred_check_branch
          %192 = sbr.rel (%p190) target = $region36
        $region35: #{tpu_custom_call.1} parent=27 // pred_region
          %193 = dma.done %s186, 256
        $region36: #{tpu_custom_call.1} parent=27 // pred_fallthru
          _
        %s194 = sand.u32 %s41, 1
        %s195 = scalar_lea.sflag [#allocation6], %s194
        %s196 = sand.u32 %s41, 1
        %s197 = smul.addr %s196, 16
        %s198 = scalar_lea.vmem [#allocation5], %s197
        %p199 = pneg %p54
        %p200 = pneg %p51
        %s201 = sand.u32 %s69, 1
        %s202 = scalar_lea.sflag [#allocation8], %s201
        %s203 = sand.u32 %s69, 1
        %s204 = smul.addr %s203, 16
        %s205 = scalar_lea.vmem [#allocation7], %s204
        %p206 = pneg %p82
        %p207 = pneg %p79
        %p208 = pneg %p108
        %p209 = pneg %p105
        %p210 = scmp.lt.s32.totalorder %s23, 0
        %s211 = scalar_select %p210, %s23, 0
        %s212 = smul.addr %s211, 8
        %s213 = scalar_lea.vmem %s2, %s212
        %s214 = smul.u32 2, %s24
        %s215 = smul.u32 2, %s24
        %p216 = scmp.lt.s32.totalorder %s23, 0
        %s217 = scalar_select %p216, %s23, 0
        %s218 = smul.addr %s217, 8
        %s219 = scalar_lea.vmem %s2, %s218
        %p220 = scmp.eq.s32.totalorder %s24, 0
        // Predicated region
        $region37: #{tpu_custom_call.1} parent=27 // pred_check
          %p221 = pneg %p220
        $region38: #{tpu_custom_call.1} parent=27 // pred_check_branch
          %223 = sbr.rel (%p221) target = $region40
        $region39: #{tpu_custom_call.1} parent=27 // pred_region
          %vm224 = vcmask 7168
          %225 = vst.msk [vmem:[#allocation2] sm:$0xff] %vm224, 0.0
          %226 = vst.msk [vmem:[#allocation3] sm:$0xff] %vm224, 0.0
          %227 = vst.msk [vmem:[#allocation4] sm:$0xff] %vm224, 0.0
        $region40: #{tpu_custom_call.1} parent=27 // pred_fallthru
          _
        %p228 = scmp.lt.s32.totalorder %s24, 5
        // Predicated region
        $region41: #{tpu_custom_call.1} parent=27 // pred_check
          %p229 = pneg %p228
        $region42: #{tpu_custom_call.1} parent=27 // pred_check_branch
          %231 = sbr.rel (%p229) target = $region44
        $region43: #{tpu_custom_call.1} parent=27 // pred_region
          %v232 = vld [vmem:[%s180] sm:$0xff]
          %v233 = vld [vmem:[%s180 + $0x8] sm:$0xff]
          %v234 = vld [vmem:[%s189] sm:$0xff]
          %v235 = vld [vmem:[%s189 + $0x8] sm:$0xff]
          %v236 = vld [vmem:[#allocation2] sm:$0xff]
          %v237 = vmul.f32 %v234, %v234
          %v238 = vmul.f32 %v235, %v235
          %v239 = vadd.f32 %v237, %v238
          %240 = vadd.xlane.f32.xlu0 %v239
          %v241 = vpop.xlane.xlu0 %240
          %v242 = vadd.f32 %v236, %v241
          %vm243 = vcmask 7168
          %244 = vst.msk [vmem:[#allocation2] sm:$0xff] %vm243, %v242
          %v245 = vld [vmem:[#allocation3] sm:$0xff]
          %v246 = vmul.f32 %v234, %v232
          %v247 = vmul.f32 %v235, %v233
          %v248 = vadd.f32 %v246, %v247
          %249 = vadd.xlane.f32.xlu0 %v248
          %v250 = vpop.xlane.xlu0 %249
          %v251 = vadd.f32 %v245, %v250
          %252 = vst.msk [vmem:[#allocation3] sm:$0xff] %vm243, %v251
          %v253 = vld [vmem:[#allocation4] sm:$0xff]
          %v254 = vmul.f32 %v232, %v232
          %v255 = vmul.f32 %v233, %v233
          %v256 = vadd.f32 %v254, %v255
          %257 = vadd.xlane.f32.xlu0 %v256
          %v258 = vpop.xlane.xlu0 %257
          %v259 = vadd.f32 %v253, %v258
          %260 = vst.msk [vmem:[#allocation4] sm:$0xff] %vm243, %v259
        $region44: #{tpu_custom_call.1} parent=27 // pred_fallthru
          _
        %p261 = scmp.eq.s32.totalorder %s24, 5
        // Predicated region
        $region45: #{tpu_custom_call.1} parent=27 // pred_check
          %p262 = pneg %p261
        $region46: #{tpu_custom_call.1} parent=27 // pred_check_branch
          %264 = sbr.rel (%p262) target = $region48
        $region47: #{tpu_custom_call.1} parent=27 // pred_region
          %v265 = vld [vmem:[%s180] sm:$0xff]
          %v266 = vld [vmem:[%s180 + $0x8] sm:$0xff]
          %v267 = vld [vmem:[%s189] sm:$0xff]
          %v268 = vld [vmem:[%s189 + $0x8] sm:$0xff]
          %s269 = smul.u32 %s24, 256
          %v270 = vlaneseq
          %v271 = vand.u32 %v270, 127
          %v272 = vadd.s32 %v271, 128
          %v273 = vstv %s269
          %v274 = vadd.s32 %v273, %v271
          %v275 = vadd.s32 %v273, %v272
          %vm276 = vcmp.lt.s32.totalorder %v274, 1500
          %vm277 = vcmp.lt.s32.totalorder %v275, 1500
          %v278 = vsel %vm276, %v265, 0.0
          %v279 = vsel %vm277, %v266, 0.0
          %v280 = vsel %vm276, %v267, 0.0
          %v281 = vsel %vm277, %v268, 0.0
          %v282 = vld [vmem:[#allocation2] sm:$0xff]
          %v283 = vmul.f32 %v280, %v280
          %v284 = vmul.f32 %v281, %v281
          %v285 = vadd.f32 %v283, %v284
          %286 = vadd.xlane.f32.xlu0 %v285
          %v287 = vpop.xlane.xlu0 %286
          %v288 = vadd.f32 %v282, %v287
          %vm289 = vcmask 7168
          %290 = vst.msk [vmem:[#allocation2] sm:$0xff] %vm289, %v288
          %v291 = vld [vmem:[#allocation3] sm:$0xff]
          %v292 = vmul.f32 %v280, %v278
          %v293 = vmul.f32 %v281, %v279
          %v294 = vadd.f32 %v292, %v293
          %295 = vadd.xlane.f32.xlu0 %v294
          %v296 = vpop.xlane.xlu0 %295
          %v297 = vadd.f32 %v291, %v296
          %298 = vst.msk [vmem:[#allocation3] sm:$0xff] %vm289, %v297
          %v299 = vld [vmem:[#allocation4] sm:$0xff]
          %v300 = vmul.f32 %v278, %v278
          %v301 = vmul.f32 %v279, %v279
          %v302 = vadd.f32 %v300, %v301
          %303 = vadd.xlane.f32.xlu0 %v302
          %v304 = vpop.xlane.xlu0 %303
          %v305 = vadd.f32 %v299, %v304
          %306 = vst.msk [vmem:[#allocation4] sm:$0xff] %vm289, %v305
          %v307 = vld [vmem:[#allocation2] sm:$0xff]
          %v308 = vld [vmem:[#allocation3] sm:$0xff]
          %v309 = vld [vmem:[#allocation4] sm:$0xff]
          %v310 = vadd.f32 %v308, 1.1920929e-07
          %v311 = vadd.f32 %v307, 1.1920929e-07
          %v312 = vrcp.pop %v311
          %v313 = vmul.f32 %v310, %v312
          %v314 = vmul.f32 %v313, %v313
          %v315 = vmul.f32 %v314, %v307
          %v316 = vmul.f32 %v313, 2.0
          %v317 = vmul.f32 %v316, %v308
          %v318 = vsub.f32 %v309, %v317
          %v319 = vadd.f32 %v318, %v315
          %v320 = vmax.f32 %v319, 0.0
          %v321 = vadd.f32 %v315, 1.1920929e-07
          %v322 = vadd.f32 %v320, 1.1920929e-07
          %v323 = vrcp.pop %v322
          %v324 = vmul.f32 %v321, %v323
          %v325 = vlog2.pop %v324
          %v326 = vmul.f32 %v325, 0.6931472
          %v327 = vmul.f32 %v326, 0.4342945
          %v328 = vmul.f32 %v327, 10.0
          %329 = vst.msk [vmem:[%s219] sm:$0xff] %vm289, %v328
        $region48: #{tpu_custom_call.1} parent=27 // pred_fallthru
          _
        %p330 = scmp.lt.s32.totalorder %s23, 0
        %s331 = scalar_select %p330, %s23, 0
        %s332 = smul.addr %s331, 8
        %s333 = scalar_lea.vmem %s2, %s332
        // Predicated region
        $region49: #{tpu_custom_call.1} parent=27 // pred_check
          %p334 = pneg %p105
        $region50: #{tpu_custom_call.1} parent=27 // pred_check_branch
          %336 = sbr.rel (%p334) target = $region52
        $region51: #{tpu_custom_call.1} parent=27 // pred_region
          _
        $region52: #{tpu_custom_call.1} parent=27 // pred_fallthru
          _
        // Predicated region
        $region53: #{tpu_custom_call.1} parent=27 // pred_check
          %p337 = pneg %p105
        $region54: #{tpu_custom_call.1} parent=27 // pred_check_branch
          %339 = sbr.rel (%p337) target = $region56
        $region55: #{tpu_custom_call.1} parent=27 // pred_region
          %p340 = scmp.lt.s32.totalorder %s23, 0
          %s341 = scalar_select %p340, %s23, 0
          %s342 = smul.addr %s341, 8
          %s343 = scalar_lea.vmem %s2, %s342
        $region56: #{tpu_custom_call.1} parent=27 // pred_fallthru
          _
      $region28: #{tpu_custom_call.1} parent=5 // pred_fallthru
        _
      %p344 = scmp.le.s32.totalorder 2, %s14
      // Predicated region
      $region57: #{tpu_custom_call.1} parent=5 // pred_check
        %p345 = pneg %p344
      $region58: #{tpu_custom_call.1} parent=5 // pred_check_branch
        %347 = sbr.rel (%p345) target = $region60
      $region59: #{tpu_custom_call.1} parent=5 // pred_region
        %s348 = ssub.s32 %s14, 2
      $region60: #{tpu_custom_call.1} parent=5 // pred_fallthru
        _
    $region6: #{tpu_custom_call.1} parent=1 // loop_footer
      %s18 = sadd.s32 1, %s14
    $region7: #{tpu_custom_call.1} parent=1 // loop_footer_branch
      %13 = sbr.rel target = $region3
    $region8: #{tpu_custom_call.1} parent=1 // loop_exit
      _
    %349 = vsyncpa [#allocation6], 1
    %s350 = scalar_lea.sflag [#allocation6], 1
    %351 = vsyncpa %s350, 1
    %352 = vsyncpa [#allocation8], 1
    %s353 = scalar_lea.sflag [#allocation8], 1
    %354 = vsyncpa %s353, 1

</llo_original>
